<compile_context>
chip_gen: v6e
topology: v6e:2x2x1
jax: 0.10.0
libtpu: 0.0.40
codegen_flags: <defaults>
</compile_context>

<pallas_src>
import functools

import jax
import jax.numpy as jnp
import numpy as np
from jax.experimental import pallas as pl
from jax.experimental.pallas import tpu as pltpu

LANE = 128


def _round_up(n, m=LANE):
    return ((n + m - 1) // m) * m


def _pad_to(x, shape):
    return jnp.pad(x, [(0, t - s) for s, t in zip(x.shape, shape)])


# ---------------------------------------------------------------------------
# Fused kernel: vision linear + text (one-hot embed, mean-pool, linear)
#               + L2-normalize + exp(logit_scale) * img @ txt.T
# All matmuls accumulate in f32 on the MXU; padded rows/cols are zero and do
# not perturb norms or similarities; padded class columns are sliced off
# outside the kernel.
# ---------------------------------------------------------------------------
def _siglip_fused_kernel(scale_ref, x_ref, wv_ref, bv_ref, tok_ref,
                         emb_ref, wt_ref, bt_ref, o_ref, *, seq):
    f32 = jnp.float32
    eps = f32(1e-12)  # torch F.normalize-style eps: avoids NaN on zero rows

    # ---- vision stand-in encoder: (B, K) @ (K, Dp) + b_v -------------------
    img = jnp.dot(x_ref[...], wv_ref[...],
                  preferred_element_type=jnp.float32) + bv_ref[...]

    # ---- text stand-in encoder, fully in-kernel ----------------------------
    cs = tok_ref.shape[0]          # num_classes * seq
    v = emb_ref.shape[0]           # padded vocab (lane-dense)
    c_pad = o_ref.shape[1]         # padded class axis (lane-dense output)

    # Token-embedding lookup as a one-hot matmul (gather stays on the MXU).
    onehot = (tok_ref[...] ==
              jax.lax.broadcasted_iota(jnp.int32, (cs, v), 1)).astype(f32)
    tok_emb = jnp.dot(onehot, emb_ref[...],
                      preferred_element_type=jnp.float32)          # (cs, Dp)

    # Mean-pool over the sequence as a small (c_pad, cs) pooling matmul;
    # rows >= num_classes are all-zero (padded classes).
    row = jax.lax.broadcasted_iota(jnp.int32, (c_pad, cs), 0)
    col = jax.lax.broadcasted_iota(jnp.int32, (c_pad, cs), 1)
    in_row = (col >= row * seq) & (col < (row + 1) * seq)
    pool = jnp.where(in_row, f32(1.0 / seq), f32(0.0))              # (c_pad, cs)
    txt_pooled = jnp.dot(pool, tok_emb,
                         preferred_element_type=jnp.float32)        # (c_pad, Dp)
    txt = jnp.dot(txt_pooled, wt_ref[...],
                  preferred_element_type=jnp.float32) + bt_ref[...]

    # ---- exact Siglip.forward hot path --------------------------------------
    img_n = img * jax.lax.rsqrt(
        jnp.sum(img * img, axis=-1, keepdims=True) + eps)
    txt_n = txt * jax.lax.rsqrt(
        jnp.sum(txt * txt, axis=-1, keepdims=True) + eps)

    # img_n @ txt_n.T without materializing a transpose.
    sim = jax.lax.dot_general(
        img_n, txt_n,
        dimension_numbers=(((1,), (1,)), ((), ())),
        preferred_element_type=jnp.float32)                         # (B, c_pad)

    o_ref[...] = jnp.exp(scale_ref[0]) * sim


# ---------------------------------------------------------------------------
# Full forward (mirrors Siglip.forward): returns (logits, 0).
# ---------------------------------------------------------------------------
def siglip_forward(image, token_ids, embed_table, w_v, b_v, w_t, b_t,
                   logit_scale):
    # TODO(synk): pretrained SiglipModel vision/text transformers + tokenizer
    # are not loadable here; flatten+linear (vision) and token-embedding
    # mean-pool + linear (text) are deterministic stand-ins for
    # vision_model(image).pooler_output / text_model(prompts).pooler_output.
    b = image.shape[0]
    num_classes, seq = token_ids.shape
    vocab, d = embed_table.shape
    k_v = int(np.prod(image.shape[1:]))

    # Zero-pad to 128-lane-dense shapes (zeros do not affect norms / dots).
    d_pad = _round_up(d)
    v_pad = _round_up(vocab)
    c_pad = _round_up(num_classes)
    k_pad = _round_up(k_v)

    x_flat = _pad_to(image.reshape(b, k_v), (b, k_pad))
    wv_p = _pad_to(w_v, (k_pad, d_pad))
    bv_p = _pad_to(b_v, (1, d_pad))
    emb_p = _pad_to(embed_table, (v_pad, d_pad))
    wt_p = _pad_to(w_t, (d_pad, d_pad))
    bt_p = _pad_to(b_t, (1, d_pad))
    tok_col = token_ids.reshape(num_classes * seq, 1).astype(jnp.int32)

    kernel = functools.partial(_siglip_fused_kernel, seq=seq)
    vmem = pltpu.MemorySpace.VMEM
    logits_pad = pl.pallas_call(
        kernel,
        out_shape=jax.ShapeDtypeStruct((b, c_pad), jnp.float32),
        in_specs=[
            pl.BlockSpec(memory_space=pltpu.MemorySpace.SMEM),   # logit_scale
            pl.BlockSpec(memory_space=vmem),                     # x_flat
            pl.BlockSpec(memory_space=vmem),                     # w_v
            pl.BlockSpec(memory_space=vmem),                     # b_v
            pl.BlockSpec(memory_space=vmem),                     # token ids
            pl.BlockSpec(memory_space=vmem),                     # embed_table
            pl.BlockSpec(memory_space=vmem),                     # w_t
            pl.BlockSpec(memory_space=vmem),                     # b_t
        ],
        out_specs=pl.BlockSpec(memory_space=vmem),
    )(logit_scale, x_flat, wv_p, bv_p, tok_col, emb_p, wt_p, bt_p)

    # Padded class columns are garbage-by-construction; slice to real classes.
    return logits_pad[:, :num_classes], 0


if __name__ == "__main__":
    key = jax.random.PRNGKey(0)
    B, C_IN, H, W = 2, 4, 16, 16            # image (NCHW)
    NUM_CLASSES, SEQ, VOCAB, D = 8, 8, 64, 32

    keys = jax.random.split(key, 8)
    image = jax.random.normal(keys[0], (B, C_IN, H, W), jnp.float32)
    token_ids = jax.random.randint(keys[1], (NUM_CLASSES, SEQ), 0, VOCAB)

    # Deterministic synthetic parameters (module __init__ / stand-in encoders).
    embed_table = 0.02 * jax.random.normal(keys[2], (VOCAB, D), jnp.float32)
    w_v = jax.random.normal(keys[3], (C_IN * H * W, D), jnp.float32) / jnp.sqrt(
        float(C_IN * H * W))
    b_v = 0.01 * jax.random.normal(keys[4], (1, D), jnp.float32)
    w_t = jax.random.normal(keys[5], (D, D), jnp.float32) / jnp.sqrt(float(D))
    b_t = 0.01 * jax.random.normal(keys[6], (1, D), jnp.float32)
    # CLIP-style logit_scale parameter init: log(1/0.07); forward uses .exp().
    logit_scale = jnp.array([jnp.log(1.0 / 0.07)], jnp.float32)

    fwd = jax.jit(siglip_forward)
    logits, zero = fwd(image, token_ids, embed_table, w_v, b_v, w_t, b_t,
                       logit_scale)
    logits = jax.block_until_ready(logits)
    assert logits.shape == (B, NUM_CLASSES)

    # Pure-JAX reference for the same semantics (silent check).
    img_ref = image.reshape(B, -1) @ w_v + b_v
    txt_ref = embed_table[token_ids].mean(axis=1) @ w_t + b_t
    img_ref = img_ref / jnp.linalg.norm(img_ref, axis=-1, keepdims=True)
    txt_ref = txt_ref / jnp.linalg.norm(txt_ref, axis=-1, keepdims=True)
    ref = jnp.exp(logit_scale[0]) * img_ref @ txt_ref.T
    np.testing.assert_allclose(np.asarray(logits), np.asarray(ref),
                               rtol=1e-4, atol=1e-4)

    print("KERNEL_OK")
</pallas_src>

<mosaic_0001>
module attributes {stable_mosaic.version = 11 : i64} {
  func.func @_siglip_fused_kernel(%arg0: memref<1xf32, #tpu.memory_space<smem>>, %arg1: memref<2x1024xf32, #tpu.memory_space<vmem>>, %arg2: memref<1024x128xf32, #tpu.memory_space<vmem>>, %arg3: memref<1x128xf32, #tpu.memory_space<vmem>>, %arg4: memref<64x1xi32, #tpu.memory_space<vmem>>, %arg5: memref<128x128xf32, #tpu.memory_space<vmem>>, %arg6: memref<128x128xf32, #tpu.memory_space<vmem>>, %arg7: memref<1x128xf32, #tpu.memory_space<vmem>>, %arg8: memref<2x128xf32, #tpu.memory_space<vmem>>) attributes {dimension_semantics = [], scalar_prefetch = 0 : i64, scratch_operands = 0 : i64, tpu.core_type = #tpu.core_type<tc>} {
    %c0 = arith.constant 0 : index
    %c0_0 = arith.constant 0 : index
    %0 = vector.load %arg1[%c0, %c0_0] : memref<2x1024xf32, #tpu.memory_space<vmem>>, vector<2x1024xf32>
    %c0_1 = arith.constant 0 : index
    %c0_2 = arith.constant 0 : index
    %1 = vector.load %arg2[%c0_1, %c0_2] : memref<1024x128xf32, #tpu.memory_space<vmem>>, vector<1024x128xf32>
    %cst = arith.constant dense<0.000000e+00> : vector<2x128xf32>
    %2 = tpu.matmul %0, %1, %cst {dimension_numbers = #tpu.dot_dimension_numbers<[1], [0], [0], [1], [0, 0, 1, 1], [], []>} : vector<2x1024xf32>, vector<1024x128xf32>, vector<2x128xf32> -> vector<2x128xf32>
    %c0_3 = arith.constant 0 : index
    %c0_4 = arith.constant 0 : index
    %3 = vector.load %arg3[%c0_3, %c0_4] : memref<1x128xf32, #tpu.memory_space<vmem>>, vector<1x128xf32>
    %4 = vector.broadcast %3 : vector<1x128xf32> to vector<2x128xf32>
    %5 = arith.addf %2, %4 : vector<2x128xf32>
    %c0_5 = arith.constant 0 : index
    %c0_6 = arith.constant 0 : index
    %6 = vector.load %arg4[%c0_5, %c0_6] : memref<64x1xi32, #tpu.memory_space<vmem>>, vector<64x1xi32>
    %7 = tpu.iota {dimensions = array<i32: 1>} : vector<64x128xi32>
    %8 = vector.broadcast %6 : vector<64x1xi32> to vector<64x128xi32>
    %9 = arith.cmpi eq, %8, %7 : vector<64x128xi32>
    %10 = arith.extui %9 : vector<64x128xi1> to vector<64x128xi32>
    %11 = arith.sitofp %10 : vector<64x128xi32> to vector<64x128xf32>
    %c0_7 = arith.constant 0 : index
    %c0_8 = arith.constant 0 : index
    %12 = vector.load %arg5[%c0_7, %c0_8] : memref<128x128xf32, #tpu.memory_space<vmem>>, vector<128x128xf32>
    %cst_9 = arith.constant dense<0.000000e+00> : vector<64x128xf32>
    %13 = tpu.matmul %11, %12, %cst_9 {dimension_numbers = #tpu.dot_dimension_numbers<[1], [0], [0], [1], [0, 0, 1, 1], [], []>} : vector<64x128xf32>, vector<128x128xf32>, vector<64x128xf32> -> vector<64x128xf32>
    %14 = tpu.iota {dimensions = array<i32: 0>} : vector<128x64xi32>
    %15 = tpu.iota {dimensions = array<i32: 1>} : vector<128x64xi32>
    %c8_i32 = arith.constant 8 : i32
    %16 = vector.broadcast %c8_i32 : i32 to vector<128x64xi32>
    %17 = arith.muli %14, %16 : vector<128x64xi32>
    %18 = arith.cmpi sge, %15, %17 : vector<128x64xi32>
    %c1_i32 = arith.constant 1 : i32
    %19 = vector.broadcast %c1_i32 : i32 to vector<128x64xi32>
    %20 = arith.addi %14, %19 : vector<128x64xi32>
    %c8_i32_10 = arith.constant 8 : i32
    %21 = vector.broadcast %c8_i32_10 : i32 to vector<128x64xi32>
    %22 = arith.muli %20, %21 : vector<128x64xi32>
    %23 = arith.cmpi slt, %15, %22 : vector<128x64xi32>
    %24 = arith.andi %18, %23 : vector<128x64xi1>
    %cst_11 = arith.constant 1.250000e-01 : f32
    %cst_12 = arith.constant 0.000000e+00 : f32
    %25 = vector.broadcast %cst_11 : f32 to vector<128x64xf32>
    %26 = vector.broadcast %cst_12 : f32 to vector<128x64xf32>
    %27 = arith.select %24, %25, %26 : vector<128x64xi1>, vector<128x64xf32>
    %cst_13 = arith.constant dense<0.000000e+00> : vector<128x128xf32>
    %28 = tpu.matmul %27, %13, %cst_13 {dimension_numbers = #tpu.dot_dimension_numbers<[1], [0], [0], [1], [0, 0, 1, 1], [], []>} : vector<128x64xf32>, vector<64x128xf32>, vector<128x128xf32> -> vector<128x128xf32>
    %c0_14 = arith.constant 0 : index
    %c0_15 = arith.constant 0 : index
    %29 = vector.load %arg6[%c0_14, %c0_15] : memref<128x128xf32, #tpu.memory_space<vmem>>, vector<128x128xf32>
    %cst_16 = arith.constant dense<0.000000e+00> : vector<128x128xf32>
    %30 = tpu.matmul %28, %29, %cst_16 {dimension_numbers = #tpu.dot_dimension_numbers<[1], [0], [0], [1], [0, 0, 1, 1], [], []>} : vector<128x128xf32>, vector<128x128xf32>, vector<128x128xf32> -> vector<128x128xf32>
    %c0_17 = arith.constant 0 : index
    %c0_18 = arith.constant 0 : index
    %31 = vector.load %arg7[%c0_17, %c0_18] : memref<1x128xf32, #tpu.memory_space<vmem>>, vector<1x128xf32>
    %32 = vector.broadcast %31 : vector<1x128xf32> to vector<128x128xf32>
    %33 = arith.addf %30, %32 : vector<128x128xf32>
    %34 = arith.mulf %5, %5 : vector<2x128xf32>
    %cst_19 = arith.constant dense<0.000000e+00> : vector<2xf32>
    %35 = vector.multi_reduction <add>, %34, %cst_19 [1] : vector<2x128xf32> to vector<2xf32>
    %36 = vector.shape_cast %35 : vector<2xf32> to vector<2x1xf32>
    %cst_20 = arith.constant 9.99999996E-13 : f32
    %37 = vector.broadcast %cst_20 : f32 to vector<2x1xf32>
    %38 = arith.addf %36, %37 : vector<2x1xf32>
    %39 = math.rsqrt %38 : vector<2x1xf32>
    %40 = vector.broadcast %39 : vector<2x1xf32> to vector<2x128xf32>
    %41 = arith.mulf %5, %40 : vector<2x128xf32>
    %42 = arith.mulf %33, %33 : vector<128x128xf32>
    %cst_21 = arith.constant dense<0.000000e+00> : vector<128xf32>
    %43 = vector.multi_reduction <add>, %42, %cst_21 [1] : vector<128x128xf32> to vector<128xf32>
    %44 = vector.shape_cast %43 : vector<128xf32> to vector<128x1xf32>
    %cst_22 = arith.constant 9.99999996E-13 : f32
    %45 = vector.broadcast %cst_22 : f32 to vector<128x1xf32>
    %46 = arith.addf %44, %45 : vector<128x1xf32>
    %47 = math.rsqrt %46 : vector<128x1xf32>
    %48 = vector.broadcast %47 : vector<128x1xf32> to vector<128x128xf32>
    %49 = arith.mulf %33, %48 : vector<128x128xf32>
    %cst_23 = arith.constant dense<0.000000e+00> : vector<2x128xf32>
    %50 = tpu.matmul %41, %49, %cst_23 {dimension_numbers = #tpu.dot_dimension_numbers<[1], [1], [0], [0], [0, 0, 1, 0], [], []>} : vector<2x128xf32>, vector<128x128xf32>, vector<2x128xf32> -> vector<2x128xf32>
    %c0_24 = arith.constant 0 : index
    %51 = memref.load %arg0[%c0_24] : memref<1xf32, #tpu.memory_space<smem>>
    %52 = math.exp %51 : f32
    %53 = vector.broadcast %52 : f32 to vector<2x128xf32>
    %54 = arith.mulf %53, %50 : vector<2x128xf32>
    %c0_25 = arith.constant 0 : index
    %c0_26 = arith.constant 0 : index
    %55 = vector.load %arg8[%c0_25, %c0_26] : memref<2x128xf32, #tpu.memory_space<vmem>>, vector<2x128xf32>
    tpu.vector_store %arg8[%c0_25, %c0_26], %54 {strides = array<i32>} : memref<2x128xf32, #tpu.memory_space<vmem>>, vector<2x128xf32>,
    return
  }
}

</mosaic_0001>

<llo_original>
// kernel: siglip_forward.1
$region0: #{siglip_forward.1}
  #allocation0 [shape = 'u32[]', space=smem, size = 0x4, offset = 0x4, fixed_abs, tag = 'smem constant byte address 0x4 - core index']
  #allocation1 [shape = 'u32[144,128]{1,0:T(1,128)}', space=vmem, size = 0x12000, scoped, tag = 'internal scratch']
  #allocation2 [shape = 'f32[1]{0:T(128)S(6)}', space=smem, size = 0x200, scoped, tag = 'scoped memory for siglip_forward.1']
  %s0 = inlined_call_operand.<no memory space> [shape: f32[1], index: 0, kind: input, shape index: {}]
  %s1 = inlined_call_operand.vmem [shape: f32[2,1024], index: 1, kind: input, shape index: {}]
  %s2 = inlined_call_operand.vmem [shape: f32[1024,128], index: 2, kind: input, shape index: {}]
  %s3 = inlined_call_operand.vmem [shape: f32[1,128], index: 3, kind: input, shape index: {}]
  %s4 = inlined_call_operand.vmem [shape: s32[64,1], index: 4, kind: input, shape index: {}]
  %s5 = inlined_call_operand.vmem [shape: f32[128,128], index: 5, kind: input, shape index: {}]
  %s6 = inlined_call_operand.vmem [shape: f32[128,128], index: 6, kind: input, shape index: {}]
  %s7 = inlined_call_operand.vmem [shape: f32[1,128], index: 7, kind: input, shape index: {}]
  %s8 = inlined_call_operand.hbm [shape: f32[2,128], index: 8, kind: output, shape index: {}]
  %s9 = sld [smem:[#allocation0]]
  $region42: #{siglip_forward.1} parent=0
    _
  %s11 = ssub.s32 1, %s9
  %s12 = scalar_select 0, %s11, %s9
  %13 = sst [smem:[#allocation2]] %s0
  $region1: #{siglip_forward.1} parent=0
    #allocation3 [shape = 'u8[1024]{0}', space=vmem, size = 0x400, scoped, tag = 'output window, operand 0, single buffered']
    #allocation4 [shape = 's32[1]{0}', space=sflag, size = 0x4, scoped, tag = 'scoped memory for siglip_forward.1']
    %14 = vsyncpa [#allocation4], 0
    // Predicated region
    $region2: #{siglip_forward.1} parent=1 // pred_check
      _
    $region3: #{siglip_forward.1} parent=1 // pred_check_branch
      %16 = sbr.rel (0) target = $region5
    $region4: #{siglip_forward.1} parent=1 // pred_region
      _
    $region5: #{siglip_forward.1} parent=1 // pred_fallthru
      _
    // Predicated region
    $region6: #{siglip_forward.1} parent=1 // pred_check
      _
    $region7: #{siglip_forward.1} parent=1 // pred_check_branch
      %18 = sbr.rel (0) target = $region9
    $region8: #{siglip_forward.1} parent=1 // pred_region
      _
    $region9: #{siglip_forward.1} parent=1 // pred_fallthru
      _
    // Predicated region
    $region10: #{siglip_forward.1} parent=1 // pred_check
      _
    $region11: #{siglip_forward.1} parent=1 // pred_check_branch
      %20 = sbr.rel (0) target = $region13
    $region12: #{siglip_forward.1} parent=1 // pred_region
      _
    $region13: #{siglip_forward.1} parent=1 // pred_fallthru
      _
    // Predicated region
    $region14: #{siglip_forward.1} parent=1 // pred_check
      _
    $region15: #{siglip_forward.1} parent=1 // pred_check_branch
      %22 = sbr.rel (0) target = $region17
    $region16: #{siglip_forward.1} parent=1 // pred_region
      _
    $region17: #{siglip_forward.1} parent=1 // pred_fallthru
      _
    // Predicated region
    $region18: #{siglip_forward.1} parent=1 // pred_check
      _
    $region19: #{siglip_forward.1} parent=1 // pred_check_branch
      %24 = sbr.rel (0) target = $region21
    $region20: #{siglip_forward.1} parent=1 // pred_region
      _
    $region21: #{siglip_forward.1} parent=1 // pred_fallthru
      _
    // Predicated region
    $region22: #{siglip_forward.1} parent=1 // pred_check
      _
    $region23: #{siglip_forward.1} parent=1 // pred_check_branch
      %26 = sbr.rel (0) target = $region25
    $region24: #{siglip_forward.1} parent=1 // pred_region
      _
    $region25: #{siglip_forward.1} parent=1 // pred_fallthru
      _
    // Predicated region
    $region26: #{siglip_forward.1} parent=1 // pred_check
      _
    $region27: #{siglip_forward.1} parent=1 // pred_check_branch
      %28 = sbr.rel (0) target = $region29
    $region28: #{siglip_forward.1} parent=1 // pred_region
      _
    $region29: #{siglip_forward.1} parent=1 // pred_fallthru
      _
    // Predicated region
    $region30: #{siglip_forward.1} parent=1 // pred_check
      _
    $region31: #{siglip_forward.1} parent=1 // pred_check_branch
      %30 = sbr.rel (0) target = $region33
    $region32: #{siglip_forward.1} parent=1 // pred_region
      _
    $region33: #{siglip_forward.1} parent=1 // pred_fallthru
      _
    %v31 = vld [vmem:[%s1] sm:$0xff]
    %v32 = vld [vmem:[%s1 + $0x8] sm:$0xff]
    %v33 = vld [vmem:[%s2] sm:$0xff]
    %v34 = vld [vmem:[%s2 + $0x8] sm:$0xff]
    %v35 = vld [vmem:[%s2 + $0x10] sm:$0xff]
    %v36 = vld [vmem:[%s2 + $0x18] sm:$0xff]
    %v37 = vld [vmem:[%s2 + $0x20] sm:$0xff]
    %v38 = vld [vmem:[%s2 + $0x28] sm:$0xff]
    %v39 = vld [vmem:[%s2 + $0x30] sm:$0xff]
    %v40 = vld [vmem:[%s2 + $0x38] sm:$0xff]
    %v41 = vld [vmem:[%s2 + $0x40] sm:$0xff]
    %v42 = vld [vmem:[%s2 + $0x48] sm:$0xff]
    %v43 = vld [vmem:[%s2 + $0x50] sm:$0xff]
    %v44 = vld [vmem:[%s2 + $0x58] sm:$0xff]
    %v45 = vld [vmem:[%s2 + $0x60] sm:$0xff]
    %v46 = vld [vmem:[%s2 + $0x68] sm:$0xff]
    %v47 = vld [vmem:[%s2 + $0x70] sm:$0xff]
    %v48 = vld [vmem:[%s2 + $0x78] sm:$0xff]
    %v49 = vld [vmem:[%s2 + $0x80] sm:$0xff]
    %v50 = vld [vmem:[%s2 + $0x88] sm:$0xff]
    %v51 = vld [vmem:[%s2 + $0x90] sm:$0xff]
    %v52 = vld [vmem:[%s2 + $0x98] sm:$0xff]
    %v53 = vld [vmem:[%s2 + $0xa0] sm:$0xff]
    %v54 = vld [vmem:[%s2 + $0xa8] sm:$0xff]
    %v55 = vld [vmem:[%s2 + $0xb0] sm:$0xff]
    %v56 = vld [vmem:[%s2 + $0xb8] sm:$0xff]
    %v57 = vld [vmem:[%s2 + $0xc0] sm:$0xff]
    %v58 = vld [vmem:[%s2 + $0xc8] sm:$0xff]
    %v59 = vld [vmem:[%s2 + $0xd0] sm:$0xff]
    %v60 = vld [vmem:[%s2 + $0xd8] sm:$0xff]
    %v61 = vld [vmem:[%s2 + $0xe0] sm:$0xff]
    %v62 = vld [vmem:[%s2 + $0xe8] sm:$0xff]
    %v63 = vld [vmem:[%s2 + $0xf0] sm:$0xff]
    %v64 = vld [vmem:[%s2 + $0xf8] sm:$0xff]
    %v65 = vld [vmem:[%s2 + $0x100] sm:$0xff]
    %v66 = vld [vmem:[%s2 + $0x108] sm:$0xff]
    %v67 = vld [vmem:[%s2 + $0x110] sm:$0xff]
    %v68 = vld [vmem:[%s2 + $0x118] sm:$0xff]
    %v69 = vld [vmem:[%s2 + $0x120] sm:$0xff]
    %v70 = vld [vmem:[%s2 + $0x128] sm:$0xff]
    %v71 = vld [vmem:[%s2 + $0x130] sm:$0xff]
    %v72 = vld [vmem:[%s2 + $0x138] sm:$0xff]
    %v73 = vld [vmem:[%s2 + $0x140] sm:$0xff]
    %v74 = vld [vmem:[%s2 + $0x148] sm:$0xff]
    %v75 = vld [vmem:[%s2 + $0x150] sm:$0xff]
    %v76 = vld [vmem:[%s2 + $0x158] sm:$0xff]
    %v77 = vld [vmem:[%s2 + $0x160] sm:$0xff]
    %v78 = vld [vmem:[%s2 + $0x168] sm:$0xff]
    %v79 = vld [vmem:[%s2 + $0x170] sm:$0xff]
    %v80 = vld [vmem:[%s2 + $0x178] sm:$0xff]
    %v81 = vld [vmem:[%s2 + $0x180] sm:$0xff]
    %v82 = vld [vmem:[%s2 + $0x188] sm:$0xff]
    %v83 = vld [vmem:[%s2 + $0x190] sm:$0xff]
    %v84 = vld [vmem:[%s2 + $0x198] sm:$0xff]
    %v85 = vld [vmem:[%s2 + $0x1a0] sm:$0xff]
    %v86 = vld [vmem:[%s2 + $0x1a8] sm:$0xff]
    %v87 = vld [vmem:[%s2 + $0x1b0] sm:$0xff]
    %v88 = vld [vmem:[%s2 + $0x1b8] sm:$0xff]
    %v89 = vld [vmem:[%s2 + $0x1c0] sm:$0xff]
    %v90 = vld [vmem:[%s2 + $0x1c8] sm:$0xff]
    %v91 = vld [vmem:[%s2 + $0x1d0] sm:$0xff]
    %v92 = vld [vmem:[%s2 + $0x1d8] sm:$0xff]
    %v93 = vld [vmem:[%s2 + $0x1e0] sm:$0xff]
    %v94 = vld [vmem:[%s2 + $0x1e8] sm:$0xff]
    %v95 = vld [vmem:[%s2 + $0x1f0] sm:$0xff]
    %v96 = vld [vmem:[%s2 + $0x1f8] sm:$0xff]
    %v97 = vld [vmem:[%s2 + $0x200] sm:$0xff]
    %v98 = vld [vmem:[%s2 + $0x208] sm:$0xff]
    %v99 = vld [vmem:[%s2 + $0x210] sm:$0xff]
    %v100 = vld [vmem:[%s2 + $0x218] sm:$0xff]
    %v101 = vld [vmem:[%s2 + $0x220] sm:$0xff]
    %v102 = vld [vmem:[%s2 + $0x228] sm:$0xff]
    %v103 = vld [vmem:[%s2 + $0x230] sm:$0xff]
    %v104 = vld [vmem:[%s2 + $0x238] sm:$0xff]
    %v105 = vld [vmem:[%s2 + $0x240] sm:$0xff]
    %v106 = vld [vmem:[%s2 + $0x248] sm:$0xff]
    %v107 = vld [vmem:[%s2 + $0x250] sm:$0xff]
    %v108 = vld [vmem:[%s2 + $0x258] sm:$0xff]
    %v109 = vld [vmem:[%s2 + $0x260] sm:$0xff]
    %v110 = vld [vmem:[%s2 + $0x268] sm:$0xff]
    %v111 = vld [vmem:[%s2 + $0x270] sm:$0xff]
    %v112 = vld [vmem:[%s2 + $0x278] sm:$0xff]
    %v113 = vld [vmem:[%s2 + $0x280] sm:$0xff]
    %v114 = vld [vmem:[%s2 + $0x288] sm:$0xff]
    %v115 = vld [vmem:[%s2 + $0x290] sm:$0xff]
    %v116 = vld [vmem:[%s2 + $0x298] sm:$0xff]
    %v117 = vld [vmem:[%s2 + $0x2a0] sm:$0xff]
    %v118 = vld [vmem:[%s2 + $0x2a8] sm:$0xff]
    %v119 = vld [vmem:[%s2 + $0x2b0] sm:$0xff]
    %v120 = vld [vmem:[%s2 + $0x2b8] sm:$0xff]
    %v121 = vld [vmem:[%s2 + $0x2c0] sm:$0xff]
    %v122 = vld [vmem:[%s2 + $0x2c8] sm:$0xff]
    %v123 = vld [vmem:[%s2 + $0x2d0] sm:$0xff]
    %v124 = vld [vmem:[%s2 + $0x2d8] sm:$0xff]
    %v125 = vld [vmem:[%s2 + $0x2e0] sm:$0xff]
    %v126 = vld [vmem:[%s2 + $0x2e8] sm:$0xff]
    %v127 = vld [vmem:[%s2 + $0x2f0] sm:$0xff]
    %v128 = vld [vmem:[%s2 + $0x2f8] sm:$0xff]
    %v129 = vld [vmem:[%s2 + $0x300] sm:$0xff]
    %v130 = vld [vmem:[%s2 + $0x308] sm:$0xff]
    %v131 = vld [vmem:[%s2 + $0x310] sm:$0xff]
    %v132 = vld [vmem:[%s2 + $0x318] sm:$0xff]
    %v133 = vld [vmem:[%s2 + $0x320] sm:$0xff]
    %v134 = vld [vmem:[%s2 + $0x328] sm:$0xff]
    %v135 = vld [vmem:[%s2 + $0x330] sm:$0xff]
    %v136 = vld [vmem:[%s2 + $0x338] sm:$0xff]
    %v137 = vld [vmem:[%s2 + $0x340] sm:$0xff]
    %v138 = vld [vmem:[%s2 + $0x348] sm:$0xff]
    %v139 = vld [vmem:[%s2 + $0x350] sm:$0xff]
    %v140 = vld [vmem:[%s2 + $0x358] sm:$0xff]
    %v141 = vld [vmem:[%s2 + $0x360] sm:$0xff]
    %v142 = vld [vmem:[%s2 + $0x368] sm:$0xff]
    %v143 = vld [vmem:[%s2 + $0x370] sm:$0xff]
    %v144 = vld [vmem:[%s2 + $0x378] sm:$0xff]
    %v145 = vld [vmem:[%s2 + $0x380] sm:$0xff]
    %v146 = vld [vmem:[%s2 + $0x388] sm:$0xff]
    %v147 = vld [vmem:[%s2 + $0x390] sm:$0xff]
    %v148 = vld [vmem:[%s2 + $0x398] sm:$0xff]
    %v149 = vld [vmem:[%s2 + $0x3a0] sm:$0xff]
    %v150 = vld [vmem:[%s2 + $0x3a8] sm:$0xff]
    %v151 = vld [vmem:[%s2 + $0x3b0] sm:$0xff]
    %v152 = vld [vmem:[%s2 + $0x3b8] sm:$0xff]
    %v153 = vld [vmem:[%s2 + $0x3c0] sm:$0xff]
    %v154 = vld [vmem:[%s2 + $0x3c8] sm:$0xff]
    %v155 = vld [vmem:[%s2 + $0x3d0] sm:$0xff]
    %v156 = vld [vmem:[%s2 + $0x3d8] sm:$0xff]
    %v157 = vld [vmem:[%s2 + $0x3e0] sm:$0xff]
    %v158 = vld [vmem:[%s2 + $0x3e8] sm:$0xff]
    %v159 = vld [vmem:[%s2 + $0x3f0] sm:$0xff]
    %v160 = vld [vmem:[%s2 + $0x3f8] sm:$0xff]
    %v161 = vld [vmem:[%s3] sm:$0x1]
    %v163 = vlaneseq
    %v164 = vshrl.u32 %v163, 7
    %v165 = vsub.s32 0, %v164
    %v166 = vrot.slane %v161, %v165
    %v170 = vcombine.high %v31, %v31
    %v172 = vunpack.c.l.s4 1983009808
    %v173 = vunpack.c.0.s8 %v172
    %v174 = vlaneseq
    %v175 = vshrl.u32 %v174, 7
    %v176 = vsub.s32 %v173, %v175
    %v177 = vrot.slane %v31, %v176
    %v179 = vunpack.c.l.s4 1983009808
    %v180 = vunpack.c.0.s8 %v179
    %v181 = vlaneseq
    %v182 = vshrl.u32 %v181, 7
    %v183 = vsub.s32 %v180, %v182
    %v184 = vrot.slane %v170, %v183
    %v185 = vcombine.high %v177, %v177
    %v186 = vcombine.high %v184, %v184
    %v187 = vcombine.high %v32, %v32
    %v189 = vunpack.c.l.s4 1983009808
    %v190 = vunpack.c.0.s8 %v189
    %v191 = vlaneseq
    %v192 = vshrl.u32 %v191, 7
    %v193 = vsub.s32 %v190, %v192
    %v194 = vrot.slane %v32, %v193
    %v196 = vunpack.c.l.s4 1983009808
    %v197 = vunpack.c.0.s8 %v196
    %v198 = vlaneseq
    %v199 = vshrl.u32 %v198, 7
    %v200 = vsub.s32 %v197, %v199
    %v201 = vrot.slane %v187, %v200
    %v202 = vcombine.high %v194, %v194
    %v203 = vcombine.high %v201, %v201
    %212 = vmatprep.subr.mxu0 0.0
    %213 = vmatpush1.msra.mxu0 %v48
    %214 = vmatprep.subr.mxu0 0.0
    %215 = vmatpush1.msra.mxu0 %v47
    %216 = vmatprep.subr.mxu0 0.0
    %217 = vmatpush1.msra.mxu0 %v46
    %218 = vmatprep.subr.mxu0 0.0
    %219 = vmatpush1.msra.mxu0 %v45
    %220 = vmatprep.subr.mxu0 0.0
    %221 = vmatpush1.msra.mxu0 %v44
    %222 = vmatprep.subr.mxu0 0.0
    %223 = vmatpush1.msra.mxu0 %v43
    %224 = vmatprep.subr.mxu0 0.0
    %225 = vmatpush1.msra.mxu0 %v42
    %226 = vmatprep.subr.mxu0 0.0
    %227 = vmatpush1.msra.mxu0 %v41
    %228 = vmatprep.subr.mxu0 0.0
    %229 = vmatpush1.msra.mxu0 %v40
    %230 = vmatprep.subr.mxu0 0.0
    %231 = vmatpush1.msra.mxu0 %v39
    %232 = vmatprep.subr.mxu0 0.0
    %233 = vmatpush1.msra.mxu0 %v38
    %234 = vmatprep.subr.mxu0 0.0
    %235 = vmatpush1.msra.mxu0 %v37
    %236 = vmatprep.subr.mxu0 0.0
    %237 = vmatpush1.msra.mxu0 %v36
    %238 = vmatprep.subr.mxu0 0.0
    %239 = vmatpush1.msra.mxu0 %v35
    %240 = vmatprep.subr.mxu0 0.0
    %241 = vmatpush1.msra.mxu0 %v34
    %242 = vmatprep.subr.mxu0 0.0
    %243 = vmatpush1.msra.mxu0 %v33
    %244 = vmatprep.subr.mxu0 0.0
    %245 = vmatpush2.msra.mxu0 %v64
    %246 = vmatprep.subr.mxu0 0.0
    %247 = vmatpush2.msra.mxu0 %v63
    %248 = vmatprep.subr.mxu0 0.0
    %249 = vmatpush2.msra.mxu0 %v62
    %250 = vmatprep.subr.mxu0 0.0
    %251 = vmatpush2.msra.mxu0 %v61
    %252 = vmatprep.subr.mxu0 0.0
    %253 = vmatpush2.msra.mxu0 %v60
    %254 = vmatprep.subr.mxu0 0.0
    %255 = vmatpush2.msra.mxu0 %v59
    %256 = vmatprep.subr.mxu0 0.0
    %257 = vmatpush2.msra.mxu0 %v58
    %258 = vmatprep.subr.mxu0 0.0
    %259 = vmatpush2.msra.mxu0 %v57
    %260 = vmatprep.subr.mxu0 0.0
    %261 = vmatpush2.msra.mxu0 %v56
    %262 = vmatprep.subr.mxu0 0.0
    %263 = vmatpush2.msra.mxu0 %v55
    %264 = vmatprep.subr.mxu0 0.0
    %265 = vmatpush2.msra.mxu0 %v54
    %266 = vmatprep.subr.mxu0 0.0
    %267 = vmatpush2.msra.mxu0 %v53
    %268 = vmatprep.subr.mxu0 0.0
    %269 = vmatpush2.msra.mxu0 %v52
    %270 = vmatprep.subr.mxu0 0.0
    %271 = vmatpush2.msra.mxu0 %v51
    %272 = vmatprep.subr.mxu0 0.0
    %273 = vmatpush2.msra.mxu0 %v50
    %274 = vmatprep.subr.mxu0 0.0
    %275 = vmatpush2.msra.mxu0 %v49
    %276 = vmatprep.mubr.f32.mxu0 %v185
    %277 = vmatmul.mubr.f32.gmra.mxu0 %v177
    %v278 = vpop.f32.mrf.mxu0
    %v279 = vadd.f32 %v166, %v278
    %v280 = vpop.f32.mrf.mxu0
    %281 = vdwg.mxu0
    %282 = vmatprep.subr.mxu0 0.0
    %283 = vmatpush1.msra.mxu0 %v80
    %284 = vmatprep.subr.mxu0 0.0
    %285 = vmatpush1.msra.mxu0 %v79
    %286 = vmatprep.subr.mxu0 0.0
    %287 = vmatpush1.msra.mxu0 %v78
    %288 = vmatprep.subr.mxu0 0.0
    %289 = vmatpush1.msra.mxu0 %v77
    %290 = vmatprep.subr.mxu0 0.0
    %291 = vmatpush1.msra.mxu0 %v76
    %292 = vmatprep.subr.mxu0 0.0
    %293 = vmatpush1.msra.mxu0 %v75
    %294 = vmatprep.subr.mxu0 0.0
    %295 = vmatpush1.msra.mxu0 %v74
    %296 = vmatprep.subr.mxu0 0.0
    %297 = vmatpush1.msra.mxu0 %v73
    %298 = vmatprep.subr.mxu0 0.0
    %299 = vmatpush1.msra.mxu0 %v72
    %300 = vmatprep.subr.mxu0 0.0
    %301 = vmatpush1.msra.mxu0 %v71
    %302 = vmatprep.subr.mxu0 0.0
    %303 = vmatpush1.msra.mxu0 %v70
    %304 = vmatprep.subr.mxu0 0.0
    %305 = vmatpush1.msra.mxu0 %v69
    %306 = vmatprep.subr.mxu0 0.0
    %307 = vmatpush1.msra.mxu0 %v68
    %308 = vmatprep.subr.mxu0 0.0
    %309 = vmatpush1.msra.mxu0 %v67
    %310 = vmatprep.subr.mxu0 0.0
    %311 = vmatpush1.msra.mxu0 %v66
    %312 = vmatprep.subr.mxu0 0.0
    %313 = vmatpush1.msra.mxu0 %v65
    %314 = vmatprep.subr.mxu0 0.0
    %315 = vmatpush2.msra.mxu0 %v96
    %316 = vmatprep.subr.mxu0 0.0
    %317 = vmatpush2.msra.mxu0 %v95
    %318 = vmatprep.subr.mxu0 0.0
    %319 = vmatpush2.msra.mxu0 %v94
    %320 = vmatprep.subr.mxu0 0.0
    %321 = vmatpush2.msra.mxu0 %v93
    %322 = vmatprep.subr.mxu0 0.0
    %323 = vmatpush2.msra.mxu0 %v92
    %324 = vmatprep.subr.mxu0 0.0
    %325 = vmatpush2.msra.mxu0 %v91
    %326 = vmatprep.subr.mxu0 0.0
    %327 = vmatpush2.msra.mxu0 %v90
    %328 = vmatprep.subr.mxu0 0.0
    %329 = vmatpush2.msra.mxu0 %v89
    %330 = vmatprep.subr.mxu0 0.0
    %331 = vmatpush2.msra.mxu0 %v88
    %332 = vmatprep.subr.mxu0 0.0
    %333 = vmatpush2.msra.mxu0 %v87
    %334 = vmatprep.subr.mxu0 0.0
    %335 = vmatpush2.msra.mxu0 %v86
    %336 = vmatprep.subr.mxu0 0.0
    %337 = vmatpush2.msra.mxu0 %v85
    %338 = vmatprep.subr.mxu0 0.0
    %339 = vmatpush2.msra.mxu0 %v84
    %340 = vmatprep.subr.mxu0 0.0
    %341 = vmatpush2.msra.mxu0 %v83
    %342 = vmatprep.subr.mxu0 0.0
    %343 = vmatpush2.msra.mxu0 %v82
    %344 = vmatprep.subr.mxu0 0.0
    %345 = vmatpush2.msra.mxu0 %v81
    %346 = vmatprep.mubr.f32.mxu0 %v186
    %347 = vmatmul.mubr.f32.gmra.mxu0 %v184
    %v348 = vpop.f32.mrf.mxu0
    %v349 = vadd.f32 %v279, %v348
    %v350 = vpop.f32.mrf.mxu0
    %351 = vdwg.mxu0
    %352 = vmatprep.subr.mxu0 0.0
    %353 = vmatpush1.msra.mxu0 %v112
    %354 = vmatprep.subr.mxu0 0.0
    %355 = vmatpush1.msra.mxu0 %v111
    %356 = vmatprep.subr.mxu0 0.0
    %357 = vmatpush1.msra.mxu0 %v110
    %358 = vmatprep.subr.mxu0 0.0
    %359 = vmatpush1.msra.mxu0 %v109
    %360 = vmatprep.subr.mxu0 0.0
    %361 = vmatpush1.msra.mxu0 %v108
    %362 = vmatprep.subr.mxu0 0.0
    %363 = vmatpush1.msra.mxu0 %v107
    %364 = vmatprep.subr.mxu0 0.0
    %365 = vmatpush1.msra.mxu0 %v106
    %366 = vmatprep.subr.mxu0 0.0
    %367 = vmatpush1.msra.mxu0 %v105
    %368 = vmatprep.subr.mxu0 0.0
    %369 = vmatpush1.msra.mxu0 %v104
    %370 = vmatprep.subr.mxu0 0.0
    %371 = vmatpush1.msra.mxu0 %v103
    %372 = vmatprep.subr.mxu0 0.0
    %373 = vmatpush1.msra.mxu0 %v102
    %374 = vmatprep.subr.mxu0 0.0
    %375 = vmatpush1.msra.mxu0 %v101
    %376 = vmatprep.subr.mxu0 0.0
    %377 = vmatpush1.msra.mxu0 %v100
    %378 = vmatprep.subr.mxu0 0.0
    %379 = vmatpush1.msra.mxu0 %v99
    %380 = vmatprep.subr.mxu0 0.0
    %381 = vmatpush1.msra.mxu0 %v98
    %382 = vmatprep.subr.mxu0 0.0
    %383 = vmatpush1.msra.mxu0 %v97
    %384 = vmatprep.subr.mxu0 0.0
    %385 = vmatpush2.msra.mxu0 %v128
    %386 = vmatprep.subr.mxu0 0.0
    %387 = vmatpush2.msra.mxu0 %v127
    %388 = vmatprep.subr.mxu0 0.0
    %389 = vmatpush2.msra.mxu0 %v126
    %390 = vmatprep.subr.mxu0 0.0
    %391 = vmatpush2.msra.mxu0 %v125
    %392 = vmatprep.subr.mxu0 0.0
    %393 = vmatpush2.msra.mxu0 %v124
    %394 = vmatprep.subr.mxu0 0.0
    %395 = vmatpush2.msra.mxu0 %v123
    %396 = vmatprep.subr.mxu0 0.0
    %397 = vmatpush2.msra.mxu0 %v122
    %398 = vmatprep.subr.mxu0 0.0
    %399 = vmatpush2.msra.mxu0 %v121
    %400 = vmatprep.subr.mxu0 0.0
    %401 = vmatpush2.msra.mxu0 %v120
    %402 = vmatprep.subr.mxu0 0.0
    %403 = vmatpush2.msra.mxu0 %v119
    %404 = vmatprep.subr.mxu0 0.0
    %405 = vmatpush2.msra.mxu0 %v118
    %406 = vmatprep.subr.mxu0 0.0
    %407 = vmatpush2.msra.mxu0 %v117
    %408 = vmatprep.subr.mxu0 0.0
    %409 = vmatpush2.msra.mxu0 %v116
    %410 = vmatprep.subr.mxu0 0.0
    %411 = vmatpush2.msra.mxu0 %v115
    %412 = vmatprep.subr.mxu0 0.0
    %413 = vmatpush2.msra.mxu0 %v114
    %414 = vmatprep.subr.mxu0 0.0
    %415 = vmatpush2.msra.mxu0 %v113
    %416 = vmatprep.mubr.f32.mxu0 %v202
    %417 = vmatmul.mubr.f32.gmra.mxu0 %v194
    %v418 = vpop.f32.mrf.mxu0
    %v419 = vadd.f32 %v349, %v418
    %v420 = vpop.f32.mrf.mxu0
    %421 = vdwg.mxu0
    %422 = vmatprep.subr.mxu0 0.0
    %423 = vmatpush1.msra.mxu0 %v144
    %424 = vmatprep.subr.mxu0 0.0
    %425 = vmatpush1.msra.mxu0 %v143
    %426 = vmatprep.subr.mxu0 0.0
    %427 = vmatpush1.msra.mxu0 %v142
    %428 = vmatprep.subr.mxu0 0.0
    %429 = vmatpush1.msra.mxu0 %v141
    %430 = vmatprep.subr.mxu0 0.0
    %431 = vmatpush1.msra.mxu0 %v140
    %432 = vmatprep.subr.mxu0 0.0
    %433 = vmatpush1.msra.mxu0 %v139
    %434 = vmatprep.subr.mxu0 0.0
    %435 = vmatpush1.msra.mxu0 %v138
    %436 = vmatprep.subr.mxu0 0.0
    %437 = vmatpush1.msra.mxu0 %v137
    %438 = vmatprep.subr.mxu0 0.0
    %439 = vmatpush1.msra.mxu0 %v136
    %440 = vmatprep.subr.mxu0 0.0
    %441 = vmatpush1.msra.mxu0 %v135
    %442 = vmatprep.subr.mxu0 0.0
    %443 = vmatpush1.msra.mxu0 %v134
    %444 = vmatprep.subr.mxu0 0.0
    %445 = vmatpush1.msra.mxu0 %v133
    %446 = vmatprep.subr.mxu0 0.0
    %447 = vmatpush1.msra.mxu0 %v132
    %448 = vmatprep.subr.mxu0 0.0
    %449 = vmatpush1.msra.mxu0 %v131
    %450 = vmatprep.subr.mxu0 0.0
    %451 = vmatpush1.msra.mxu0 %v130
    %452 = vmatprep.subr.mxu0 0.0
    %453 = vmatpush1.msra.mxu0 %v129
    %454 = vmatprep.subr.mxu0 0.0
    %455 = vmatpush2.msra.mxu0 %v160
    %456 = vmatprep.subr.mxu0 0.0
    %457 = vmatpush2.msra.mxu0 %v159
    %458 = vmatprep.subr.mxu0 0.0
    %459 = vmatpush2.msra.mxu0 %v158
    %460 = vmatprep.subr.mxu0 0.0
    %461 = vmatpush2.msra.mxu0 %v157
    %462 = vmatprep.subr.mxu0 0.0
    %463 = vmatpush2.msra.mxu0 %v156
    %464 = vmatprep.subr.mxu0 0.0
    %465 = vmatpush2.msra.mxu0 %v155
    %466 = vmatprep.subr.mxu0 0.0
    %467 = vmatpush2.msra.mxu0 %v154
    %468 = vmatprep.subr.mxu0 0.0
    %469 = vmatpush2.msra.mxu0 %v153
    %470 = vmatprep.subr.mxu0 0.0
    %471 = vmatpush2.msra.mxu0 %v152
    %472 = vmatprep.subr.mxu0 0.0
    %473 = vmatpush2.msra.mxu0 %v151
    %474 = vmatprep.subr.mxu0 0.0
    %475 = vmatpush2.msra.mxu0 %v150
    %476 = vmatprep.subr.mxu0 0.0
    %477 = vmatpush2.msra.mxu0 %v149
    %478 = vmatprep.subr.mxu0 0.0
    %479 = vmatpush2.msra.mxu0 %v148
    %480 = vmatprep.subr.mxu0 0.0
    %481 = vmatpush2.msra.mxu0 %v147
    %482 = vmatprep.subr.mxu0 0.0
    %483 = vmatpush2.msra.mxu0 %v146
    %484 = vmatprep.subr.mxu0 0.0
    %485 = vmatpush2.msra.mxu0 %v145
    %486 = vmatprep.mubr.f32.mxu0 %v203
    %487 = vmatmul.mubr.f32.gmra.mxu0 %v201
    %v488 = vpop.f32.mrf.mxu0
    %v489 = vadd.f32 %v419, %v488
    %v490 = vpop.f32.mrf.mxu0
    %491 = vdwg.mxu0
    %v492 = vld [vmem:[%s4] sm:$0xff]
    %v493 = vld [vmem:[%s4 + $0x8] sm:$0xff]
    %v494 = vld [vmem:[%s4 + $0x10] sm:$0xff]
    %v495 = vld [vmem:[%s4 + $0x18] sm:$0xff]
    %v496 = vld [vmem:[%s4 + $0x20] sm:$0xff]
    %v497 = vld [vmem:[%s4 + $0x28] sm:$0xff]
    %v498 = vld [vmem:[%s4 + $0x30] sm:$0xff]
    %v499 = vld [vmem:[%s4 + $0x38] sm:$0xff]
    %v500 = vlaneseq
    %v501 = vand.u32 %v500, 127
    %502 = vset.pattern.permute.xlu0 0
    %503 = vperm.xlu0 %502, %v492
    %v504 = vpop.permute.xlu0 %503
    %505 = vset.pattern.permute.xlu0 0
    %506 = vperm.xlu0 %505, %v493
    %v507 = vpop.permute.xlu0 %506
    %508 = vset.pattern.permute.xlu0 0
    %509 = vperm.xlu0 %508, %v494
    %v510 = vpop.permute.xlu0 %509
    %511 = vset.pattern.permute.xlu0 0
    %512 = vperm.xlu0 %511, %v495
    %v513 = vpop.permute.xlu0 %512
    %514 = vset.pattern.permute.xlu0 0
    %515 = vperm.xlu0 %514, %v496
    %v516 = vpop.permute.xlu0 %515
    %517 = vset.pattern.permute.xlu0 0
    %518 = vperm.xlu0 %517, %v497
    %v519 = vpop.permute.xlu0 %518
    %520 = vset.pattern.permute.xlu0 0
    %521 = vperm.xlu0 %520, %v498
    %v522 = vpop.permute.xlu0 %521
    %523 = vset.pattern.permute.xlu0 0
    %524 = vperm.xlu0 %523, %v499
    %v525 = vpop.permute.xlu0 %524
    %vm526 = vcmp.eq.s32.totalorder %v504, %v501
    %vm527 = vcmp.eq.s32.totalorder %v507, %v501
    %vm528 = vcmp.eq.s32.totalorder %v510, %v501
    %vm529 = vcmp.eq.s32.totalorder %v513, %v501
    %vm530 = vcmp.eq.s32.totalorder %v516, %v501
    %vm531 = vcmp.eq.s32.totalorder %v519, %v501
    %vm532 = vcmp.eq.s32.totalorder %v522, %v501
    %vm533 = vcmp.eq.s32.totalorder %v525, %v501
    %v534 = vsel %vm526, 1, 0
    %v535 = vsel %vm527, 1, 0
    %v536 = vsel %vm528, 1, 0
    %v537 = vsel %vm529, 1, 0
    %v538 = vsel %vm530, 1, 0
    %v539 = vsel %vm531, 1, 0
    %v540 = vsel %vm532, 1, 0
    %v541 = vsel %vm533, 1, 0
    %v542 = vcvt.s32.f32 %v534
    %v543 = vcvt.s32.f32 %v535
    %v544 = vcvt.s32.f32 %v536
    %v545 = vcvt.s32.f32 %v537
    %v546 = vcvt.s32.f32 %v538
    %v547 = vcvt.s32.f32 %v539
    %v548 = vcvt.s32.f32 %v540
    %v549 = vcvt.s32.f32 %v541
    %v550 = vld [vmem:[%s5] sm:$0xff]
    %v551 = vld [vmem:[%s5 + $0x8] sm:$0xff]
    %v552 = vld [vmem:[%s5 + $0x10] sm:$0xff]
    %v553 = vld [vmem:[%s5 + $0x18] sm:$0xff]
    %v554 = vld [vmem:[%s5 + $0x20] sm:$0xff]
    %v555 = vld [vmem:[%s5 + $0x28] sm:$0xff]
    %v556 = vld [vmem:[%s5 + $0x30] sm:$0xff]
    %v557 = vld [vmem:[%s5 + $0x38] sm:$0xff]
    %v558 = vld [vmem:[%s5 + $0x40] sm:$0xff]
    %v559 = vld [vmem:[%s5 + $0x48] sm:$0xff]
    %v560 = vld [vmem:[%s5 + $0x50] sm:$0xff]
    %v561 = vld [vmem:[%s5 + $0x58] sm:$0xff]
    %v562 = vld [vmem:[%s5 + $0x60] sm:$0xff]
    %v563 = vld [vmem:[%s5 + $0x68] sm:$0xff]
    %v564 = vld [vmem:[%s5 + $0x70] sm:$0xff]
    %v565 = vld [vmem:[%s5 + $0x78] sm:$0xff]
    %566 = vmatprep.subr.mxu0 0.0
    %567 = vmatpush1.msra.mxu0 %v565
    %568 = vmatprep.subr.mxu0 0.0
    %569 = vmatpush1.msra.mxu0 %v564
    %570 = vmatprep.subr.mxu0 0.0
    %571 = vmatpush1.msra.mxu0 %v563
    %572 = vmatprep.subr.mxu0 0.0
    %573 = vmatpush1.msra.mxu0 %v562
    %574 = vmatprep.subr.mxu0 0.0
    %575 = vmatpush1.msra.mxu0 %v561
    %576 = vmatprep.subr.mxu0 0.0
    %577 = vmatpush1.msra.mxu0 %v560
    %578 = vmatprep.subr.mxu0 0.0
    %579 = vmatpush1.msra.mxu0 %v559
    %580 = vmatprep.subr.mxu0 0.0
    %581 = vmatpush1.msra.mxu0 %v558
    %582 = vmatprep.subr.mxu0 0.0
    %583 = vmatpush1.msra.mxu0 %v557
    %584 = vmatprep.subr.mxu0 0.0
    %585 = vmatpush1.msra.mxu0 %v556
    %586 = vmatprep.subr.mxu0 0.0
    %587 = vmatpush1.msra.mxu0 %v555
    %588 = vmatprep.subr.mxu0 0.0
    %589 = vmatpush1.msra.mxu0 %v554
    %590 = vmatprep.subr.mxu0 0.0
    %591 = vmatpush1.msra.mxu0 %v553
    %592 = vmatprep.subr.mxu0 0.0
    %593 = vmatpush1.msra.mxu0 %v552
    %594 = vmatprep.subr.mxu0 0.0
    %595 = vmatpush1.msra.mxu0 %v551
    %596 = vmatprep.subr.mxu0 0.0
    %597 = vmatpush1.msra.mxu0 %v550
    %598 = vmatprep.subr.mxu0 0.0
    %599 = vmatpush2.msra.mxu0 0.0
    %600 = vmatprep.subr.mxu0 0.0
    %601 = vmatpush2.msra.mxu0 0.0
    %602 = vmatprep.subr.mxu0 0.0
    %603 = vmatpush2.msra.mxu0 0.0
    %604 = vmatprep.subr.mxu0 0.0
    %605 = vmatpush2.msra.mxu0 0.0
    %606 = vmatprep.subr.mxu0 0.0
    %607 = vmatpush2.msra.mxu0 0.0
    %608 = vmatprep.subr.mxu0 0.0
    %609 = vmatpush2.msra.mxu0 0.0
    %610 = vmatprep.subr.mxu0 0.0
    %611 = vmatpush2.msra.mxu0 0.0
    %612 = vmatprep.subr.mxu0 0.0
    %613 = vmatpush2.msra.mxu0 0.0
    %614 = vmatprep.subr.mxu0 0.0
    %615 = vmatpush2.msra.mxu0 0.0
    %616 = vmatprep.subr.mxu0 0.0
    %617 = vmatpush2.msra.mxu0 0.0
    %618 = vmatprep.subr.mxu0 0.0
    %619 = vmatpush2.msra.mxu0 0.0
    %620 = vmatprep.subr.mxu0 0.0
    %621 = vmatpush2.msra.mxu0 0.0
    %622 = vmatprep.subr.mxu0 0.0
    %623 = vmatpush2.msra.mxu0 0.0
    %624 = vmatprep.subr.mxu0 0.0
    %625 = vmatpush2.msra.mxu0 0.0
    %626 = vmatprep.subr.mxu0 0.0
    %627 = vmatpush2.msra.mxu0 0.0
    %628 = vmatprep.subr.mxu0 0.0
    %629 = vmatpush2.msra.mxu0 0.0
    %630 = vmatprep.mubr.f32.mxu0 0.0
    %631 = vmatmul.mubr.f32.gmra.mxu0 %v542
    %v632 = vpop.f32.mrf.mxu0
    %v633 = vadd.f32 0.0, %v632
    %v634 = vpop.f32.mrf.mxu0
    %635 = vmatprep.mubr.f32.mxu0 0.0
    %636 = vmatmul.mubr.f32.gmra.mxu0 %v543
    %v637 = vpop.f32.mrf.mxu0
    %v638 = vadd.f32 0.0, %v637
    %v639 = vpop.f32.mrf.mxu0
    %640 = vmatprep.mubr.f32.mxu0 0.0
    %641 = vmatmul.mubr.f32.gmra.mxu0 %v544
    %v642 = vpop.f32.mrf.mxu0
    %v643 = vadd.f32 0.0, %v642
    %v644 = vpop.f32.mrf.mxu0
    %645 = vmatprep.mubr.f32.mxu0 0.0
    %646 = vmatmul.mubr.f32.gmra.mxu0 %v545
    %v647 = vpop.f32.mrf.mxu0
    %v648 = vadd.f32 0.0, %v647
    %v649 = vpop.f32.mrf.mxu0
    %650 = vmatprep.mubr.f32.mxu0 0.0
    %651 = vmatmul.mubr.f32.gmra.mxu0 %v546
    %v652 = vpop.f32.mrf.mxu0
    %v653 = vadd.f32 0.0, %v652
    %v654 = vpop.f32.mrf.mxu0
    %655 = vmatprep.mubr.f32.mxu0 0.0
    %656 = vmatmul.mubr.f32.gmra.mxu0 %v547
    %v657 = vpop.f32.mrf.mxu0
    %v658 = vadd.f32 0.0, %v657
    %v659 = vpop.f32.mrf.mxu0
    %660 = vmatprep.mubr.f32.mxu0 0.0
    %661 = vmatmul.mubr.f32.gmra.mxu0 %v548
    %v662 = vpop.f32.mrf.mxu0
    %v663 = vadd.f32 0.0, %v662
    %v664 = vpop.f32.mrf.mxu0
    %665 = vmatprep.mubr.f32.mxu0 0.0
    %666 = vmatmul.mubr.f32.gmra.mxu0 %v549
    %v667 = vpop.f32.mrf.mxu0
    %v668 = vadd.f32 0.0, %v667
    %v669 = vpop.f32.mrf.mxu0
    %670 = vdwg.mxu0
    %v671 = vlaneseq
    %v672 = vshrl.u32 %v671, 7
    %v673 = vadd.s32 %v672, 8
    %v674 = vadd.s32 %v672, 16
    %v675 = vadd.s32 %v672, 24
    %v676 = vadd.s32 %v672, 32
    %v677 = vadd.s32 %v672, 40
    %v678 = vadd.s32 %v672, 48
    %v679 = vadd.s32 %v672, 56
    %v680 = vadd.s32 %v672, 64
    %v681 = vadd.s32 %v672, 72
    %v682 = vadd.s32 %v672, 80
    %v683 = vadd.s32 %v672, 88
    %v684 = vadd.s32 %v672, 96
    %v685 = vadd.s32 %v672, 104
    %v686 = vadd.s32 %v672, 112
    %v687 = vadd.s32 %v672, 120
    %v688 = vmul.u32 %v672, 8
    %v689 = vmul.u32 %v673, 8
    %v690 = vmul.u32 %v674, 8
    %v691 = vmul.u32 %v675, 8
    %v692 = vmul.u32 %v676, 8
    %v693 = vmul.u32 %v677, 8
    %v694 = vmul.u32 %v678, 8
    %v695 = vmul.u32 %v679, 8
    %v696 = vmul.u32 %v680, 8
    %v697 = vmul.u32 %v681, 8
    %v698 = vmul.u32 %v682, 8
    %v699 = vmul.u32 %v683, 8
    %v700 = vmul.u32 %v684, 8
    %v701 = vmul.u32 %v685, 8
    %v702 = vmul.u32 %v686, 8
    %v703 = vmul.u32 %v687, 8
    %vm704 = vcmp.ge.s32.totalorder %v501, %v688
    %vm705 = vcmp.ge.s32.totalorder %v501, %v689
    %vm706 = vcmp.ge.s32.totalorder %v501, %v690
    %vm707 = vcmp.ge.s32.totalorder %v501, %v691
    %vm708 = vcmp.ge.s32.totalorder %v501, %v692
    %vm709 = vcmp.ge.s32.totalorder %v501, %v693
    %vm710 = vcmp.ge.s32.totalorder %v501, %v694
    %vm711 = vcmp.ge.s32.totalorder %v501, %v695
    %vm712 = vcmp.ge.s32.totalorder %v501, %v696
    %vm713 = vcmp.ge.s32.totalorder %v501, %v697
    %vm714 = vcmp.ge.s32.totalorder %v501, %v698
    %vm715 = vcmp.ge.s32.totalorder %v501, %v699
    %vm716 = vcmp.ge.s32.totalorder %v501, %v700
    %vm717 = vcmp.ge.s32.totalorder %v501, %v701
    %vm718 = vcmp.ge.s32.totalorder %v501, %v702
    %vm719 = vcmp.ge.s32.totalorder %v501, %v703
    %v720 = vadd.s32 %v672, 1
    %v721 = vadd.s32 %v673, 1
    %v722 = vadd.s32 %v674, 1
    %v723 = vadd.s32 %v675, 1
    %v724 = vadd.s32 %v676, 1
    %v725 = vadd.s32 %v677, 1
    %v726 = vadd.s32 %v678, 1
    %v727 = vadd.s32 %v679, 1
    %v728 = vadd.s32 %v680, 1
    %v729 = vadd.s32 %v681, 1
    %v730 = vadd.s32 %v682, 1
    %v731 = vadd.s32 %v683, 1
    %v732 = vadd.s32 %v684, 1
    %v733 = vadd.s32 %v685, 1
    %v734 = vadd.s32 %v686, 1
    %v735 = vadd.s32 %v687, 1
    %v736 = vmul.u32 %v720, 8
    %v737 = vmul.u32 %v721, 8
    %v738 = vmul.u32 %v722, 8
    %v739 = vmul.u32 %v723, 8
    %v740 = vmul.u32 %v724, 8
    %v741 = vmul.u32 %v725, 8
    %v742 = vmul.u32 %v726, 8
    %v743 = vmul.u32 %v727, 8
    %v744 = vmul.u32 %v728, 8
    %v745 = vmul.u32 %v729, 8
    %v746 = vmul.u32 %v730, 8
    %v747 = vmul.u32 %v731, 8
    %v748 = vmul.u32 %v732, 8
    %v749 = vmul.u32 %v733, 8
    %v750 = vmul.u32 %v734, 8
    %v751 = vmul.u32 %v735, 8
    %vm752 = vcmp.lt.s32.totalorder %v501, %v736
    %vm753 = vcmp.lt.s32.totalorder %v501, %v737
    %vm754 = vcmp.lt.s32.totalorder %v501, %v738
    %vm755 = vcmp.lt.s32.totalorder %v501, %v739
    %vm756 = vcmp.lt.s32.totalorder %v501, %v740
    %vm757 = vcmp.lt.s32.totalorder %v501, %v741
    %vm758 = vcmp.lt.s32.totalorder %v501, %v742
    %vm759 = vcmp.lt.s32.totalorder %v501, %v743
    %vm760 = vcmp.lt.s32.totalorder %v501, %v744
    %vm761 = vcmp.lt.s32.totalorder %v501, %v745
    %vm762 = vcmp.lt.s32.totalorder %v501, %v746
    %vm763 = vcmp.lt.s32.totalorder %v501, %v747
    %vm764 = vcmp.lt.s32.totalorder %v501, %v748
    %vm765 = vcmp.lt.s32.totalorder %v501, %v749
    %vm766 = vcmp.lt.s32.totalorder %v501, %v750
    %vm767 = vcmp.lt.s32.totalorder %v501, %v751
    %vm768 = vmand %vm704, %vm752
    %vm769 = vmand %vm705, %vm753
    %vm770 = vmand %vm706, %vm754
    %vm771 = vmand %vm707, %vm755
    %vm772 = vmand %vm708, %vm756
    %vm773 = vmand %vm709, %vm757
    %vm774 = vmand %vm710, %vm758
    %vm775 = vmand %vm711, %vm759
    %vm776 = vmand %vm712, %vm760
    %vm777 = vmand %vm713, %vm761
    %vm778 = vmand %vm714, %vm762
    %vm779 = vmand %vm715, %vm763
    %vm780 = vmand %vm716, %vm764
    %vm781 = vmand %vm717, %vm765
    %vm782 = vmand %vm718, %vm766
    %vm783 = vmand %vm719, %vm767
    %v784 = vsel %vm768, 0.125, 0.0
    %v785 = vsel %vm769, 0.125, 0.0
    %v786 = vsel %vm770, 0.125, 0.0
    %v787 = vsel %vm771, 0.125, 0.0
    %v788 = vsel %vm772, 0.125, 0.0
    %v789 = vsel %vm773, 0.125, 0.0
    %v790 = vsel %vm774, 0.125, 0.0
    %v791 = vsel %vm775, 0.125, 0.0
    %v792 = vsel %vm776, 0.125, 0.0
    %v793 = vsel %vm777, 0.125, 0.0
    %v794 = vsel %vm778, 0.125, 0.0
    %v795 = vsel %vm779, 0.125, 0.0
    %v796 = vsel %vm780, 0.125, 0.0
    %v797 = vsel %vm781, 0.125, 0.0
    %v798 = vsel %vm782, 0.125, 0.0
    %v799 = vsel %vm783, 0.125, 0.0
    %vm800 = vcmask 523264
    %v802 = vsel %vm800, %v784, 0
    %v805 = vsel %vm800, %v785, 0
    %v808 = vsel %vm800, %v786, 0
    %v811 = vsel %vm800, %v787, 0
    %v814 = vsel %vm800, %v788, 0
    %v817 = vsel %vm800, %v789, 0
    %v820 = vsel %vm800, %v790, 0
    %v823 = vsel %vm800, %v791, 0
    %v826 = vsel %vm800, %v792, 0
    %v829 = vsel %vm800, %v793, 0
    %v832 = vsel %vm800, %v794, 0
    %v835 = vsel %vm800, %v795, 0
    %v838 = vsel %vm800, %v796, 0
    %v841 = vsel %vm800, %v797, 0
    %v844 = vsel %vm800, %v798, 0
    %v847 = vsel %vm800, %v799, 0
    %849 = vmatprep.subr.mxu0 0.0
    %850 = vmatpush1.msra.mxu0 0.0
    %851 = vmatprep.subr.mxu0 0.0
    %852 = vmatpush1.msra.mxu0 0.0
    %853 = vmatprep.subr.mxu0 0.0
    %854 = vmatpush1.msra.mxu0 0.0
    %855 = vmatprep.subr.mxu0 0.0
    %856 = vmatpush1.msra.mxu0 0.0
    %857 = vmatprep.subr.mxu0 0.0
    %858 = vmatpush1.msra.mxu0 0.0
    %859 = vmatprep.subr.mxu0 0.0
    %860 = vmatpush1.msra.mxu0 0.0
    %861 = vmatprep.subr.mxu0 0.0
    %862 = vmatpush1.msra.mxu0 0.0
    %863 = vmatprep.subr.mxu0 0.0
    %864 = vmatpush1.msra.mxu0 0.0
    %865 = vmatprep.subr.mxu0 0.0
    %866 = vmatpush1.msra.mxu0 %v668
    %867 = vmatprep.subr.mxu0 0.0
    %868 = vmatpush1.msra.mxu0 %v663
    %869 = vmatprep.subr.mxu0 0.0
    %870 = vmatpush1.msra.mxu0 %v658
    %871 = vmatprep.subr.mxu0 0.0
    %872 = vmatpush1.msra.mxu0 %v653
    %873 = vmatprep.subr.mxu0 0.0
    %874 = vmatpush1.msra.mxu0 %v648
    %875 = vmatprep.subr.mxu0 0.0
    %876 = vmatpush1.msra.mxu0 %v643
    %877 = vmatprep.subr.mxu0 0.0
    %878 = vmatpush1.msra.mxu0 %v638
    %879 = vmatprep.subr.mxu0 0.0
    %880 = vmatpush1.msra.mxu0 %v633
    %881 = vmatprep.subr.mxu0 0.0
    %882 = vmatpush2.msra.mxu0 0.0
    %883 = vmatprep.subr.mxu0 0.0
    %884 = vmatpush2.msra.mxu0 0.0
    %885 = vmatprep.subr.mxu0 0.0
    %886 = vmatpush2.msra.mxu0 0.0
    %887 = vmatprep.subr.mxu0 0.0
    %888 = vmatpush2.msra.mxu0 0.0
    %889 = vmatprep.subr.mxu0 0.0
    %890 = vmatpush2.msra.mxu0 0.0
    %891 = vmatprep.subr.mxu0 0.0
    %892 = vmatpush2.msra.mxu0 0.0
    %893 = vmatprep.subr.mxu0 0.0
    %894 = vmatpush2.msra.mxu0 0.0
    %895 = vmatprep.subr.mxu0 0.0
    %896 = vmatpush2.msra.mxu0 0.0
    %897 = vmatprep.subr.mxu0 0.0
    %898 = vmatpush2.msra.mxu0 0.0
    %899 = vmatprep.subr.mxu0 0.0
    %900 = vmatpush2.msra.mxu0 0.0
    %901 = vmatprep.subr.mxu0 0.0
    %902 = vmatpush2.msra.mxu0 0.0
    %903 = vmatprep.subr.mxu0 0.0
    %904 = vmatpush2.msra.mxu0 0.0
    %905 = vmatprep.subr.mxu0 0.0
    %906 = vmatpush2.msra.mxu0 0.0
    %907 = vmatprep.subr.mxu0 0.0
    %908 = vmatpush2.msra.mxu0 0.0
    %909 = vmatprep.subr.mxu0 0.0
    %910 = vmatpush2.msra.mxu0 0.0
    %911 = vmatprep.subr.mxu0 0.0
    %912 = vmatpush2.msra.mxu0 0.0
    %913 = vmatprep.mubr.f32.mxu0 0.0
    %914 = vmatmul.mubr.f32.gmra.mxu0 %v802
    %v915 = vpop.f32.mrf.mxu0
    %v916 = vadd.f32 0.0, %v915
    %v917 = vpop.f32.mrf.mxu0
    %918 = vmatprep.mubr.f32.mxu0 0.0
    %919 = vmatmul.mubr.f32.gmra.mxu0 %v805
    %v920 = vpop.f32.mrf.mxu0
    %v921 = vadd.f32 0.0, %v920
    %v922 = vpop.f32.mrf.mxu0
    %923 = vmatprep.mubr.f32.mxu0 0.0
    %924 = vmatmul.mubr.f32.gmra.mxu0 %v808
    %v925 = vpop.f32.mrf.mxu0
    %v926 = vadd.f32 0.0, %v925
    %v927 = vpop.f32.mrf.mxu0
    %928 = vmatprep.mubr.f32.mxu0 0.0
    %929 = vmatmul.mubr.f32.gmra.mxu0 %v811
    %v930 = vpop.f32.mrf.mxu0
    %v931 = vadd.f32 0.0, %v930
    %v932 = vpop.f32.mrf.mxu0
    %933 = vmatprep.mubr.f32.mxu0 0.0
    %934 = vmatmul.mubr.f32.gmra.mxu0 %v814
    %v935 = vpop.f32.mrf.mxu0
    %v936 = vadd.f32 0.0, %v935
    %v937 = vpop.f32.mrf.mxu0
    %938 = vmatprep.mubr.f32.mxu0 0.0
    %939 = vmatmul.mubr.f32.gmra.mxu0 %v817
    %v940 = vpop.f32.mrf.mxu0
    %v941 = vadd.f32 0.0, %v940
    %v942 = vpop.f32.mrf.mxu0
    %943 = vmatprep.mubr.f32.mxu0 0.0
    %944 = vmatmul.mubr.f32.gmra.mxu0 %v820
    %v945 = vpop.f32.mrf.mxu0
    %v946 = vadd.f32 0.0, %v945
    %v947 = vpop.f32.mrf.mxu0
    %948 = vmatprep.mubr.f32.mxu0 0.0
    %949 = vmatmul.mubr.f32.gmra.mxu0 %v823
    %v950 = vpop.f32.mrf.mxu0
    %v951 = vadd.f32 0.0, %v950
    %v952 = vpop.f32.mrf.mxu0
    %953 = vmatprep.mubr.f32.mxu0 0.0
    %954 = vmatmul.mubr.f32.gmra.mxu0 %v826
    %v955 = vpop.f32.mrf.mxu0
    %v956 = vadd.f32 0.0, %v955
    %v957 = vpop.f32.mrf.mxu0
    %958 = vmatprep.mubr.f32.mxu0 0.0
    %959 = vmatmul.mubr.f32.gmra.mxu0 %v829
    %v960 = vpop.f32.mrf.mxu0
    %v961 = vadd.f32 0.0, %v960
    %v962 = vpop.f32.mrf.mxu0
    %963 = vmatprep.mubr.f32.mxu0 0.0
    %964 = vmatmul.mubr.f32.gmra.mxu0 %v832
    %v965 = vpop.f32.mrf.mxu0
    %v966 = vadd.f32 0.0, %v965
    %v967 = vpop.f32.mrf.mxu0
    %968 = vmatprep.mubr.f32.mxu0 0.0
    %969 = vmatmul.mubr.f32.gmra.mxu0 %v835
    %v970 = vpop.f32.mrf.mxu0
    %v971 = vadd.f32 0.0, %v970
    %v972 = vpop.f32.mrf.mxu0
    %973 = vmatprep.mubr.f32.mxu0 0.0
    %974 = vmatmul.mubr.f32.gmra.mxu0 %v838
    %v975 = vpop.f32.mrf.mxu0
    %v976 = vadd.f32 0.0, %v975
    %v977 = vpop.f32.mrf.mxu0
    %978 = vmatprep.mubr.f32.mxu0 0.0
    %979 = vmatmul.mubr.f32.gmra.mxu0 %v841
    %v980 = vpop.f32.mrf.mxu0
    %v981 = vadd.f32 0.0, %v980
    %v982 = vpop.f32.mrf.mxu0
    %983 = vmatprep.mubr.f32.mxu0 0.0
    %984 = vmatmul.mubr.f32.gmra.mxu0 %v844
    %v985 = vpop.f32.mrf.mxu0
    %v986 = vadd.f32 0.0, %v985
    %v987 = vpop.f32.mrf.mxu0
    %988 = vmatprep.mubr.f32.mxu0 0.0
    %989 = vmatmul.mubr.f32.gmra.mxu0 %v847
    %v990 = vpop.f32.mrf.mxu0
    %v991 = vadd.f32 0.0, %v990
    %v992 = vpop.f32.mrf.mxu0
    %993 = vdwg.mxu0
    %v994 = vld [vmem:[%s6] sm:$0xff]
    %v995 = vld [vmem:[%s6 + $0x8] sm:$0xff]
    %v996 = vld [vmem:[%s6 + $0x10] sm:$0xff]
    %v997 = vld [vmem:[%s6 + $0x18] sm:$0xff]
    %v998 = vld [vmem:[%s6 + $0x20] sm:$0xff]
    %v999 = vld [vmem:[%s6 + $0x28] sm:$0xff]
    %v1000 = vld [vmem:[%s6 + $0x30] sm:$0xff]
    %v1001 = vld [vmem:[%s6 + $0x38] sm:$0xff]
    %v1002 = vld [vmem:[%s6 + $0x40] sm:$0xff]
    %v1003 = vld [vmem:[%s6 + $0x48] sm:$0xff]
    %v1004 = vld [vmem:[%s6 + $0x50] sm:$0xff]
    %v1005 = vld [vmem:[%s6 + $0x58] sm:$0xff]
    %v1006 = vld [vmem:[%s6 + $0x60] sm:$0xff]
    %v1007 = vld [vmem:[%s6 + $0x68] sm:$0xff]
    %v1008 = vld [vmem:[%s6 + $0x70] sm:$0xff]
    %v1009 = vld [vmem:[%s6 + $0x78] sm:$0xff]
    %v1010 = vld [vmem:[%s7] sm:$0x1]
    %v1012 = vlaneseq
    %v1013 = vshrl.u32 %v1012, 7
    %v1014 = vsub.s32 0, %v1013
    %v1015 = vrot.slane %v1010, %v1014
    %1017 = vmatprep.subr.mxu0 0.0
    %1018 = vmatpush1.msra.mxu0 %v1009
    %1019 = vmatprep.subr.mxu0 0.0
    %1020 = vmatpush1.msra.mxu0 %v1008
    %1021 = vmatprep.subr.mxu0 0.0
    %1022 = vmatpush1.msra.mxu0 %v1007
    %1023 = vmatprep.subr.mxu0 0.0
    %1024 = vmatpush1.msra.mxu0 %v1006
    %1025 = vmatprep.subr.mxu0 0.0
    %1026 = vmatpush1.msra.mxu0 %v1005
    %1027 = vmatprep.subr.mxu0 0.0
    %1028 = vmatpush1.msra.mxu0 %v1004
    %1029 = vmatprep.subr.mxu0 0.0
    %1030 = vmatpush1.msra.mxu0 %v1003
    %1031 = vmatprep.subr.mxu0 0.0
    %1032 = vmatpush1.msra.mxu0 %v1002
    %1033 = vmatprep.subr.mxu0 0.0
    %1034 = vmatpush1.msra.mxu0 %v1001
    %1035 = vmatprep.subr.mxu0 0.0
    %1036 = vmatpush1.msra.mxu0 %v1000
    %1037 = vmatprep.subr.mxu0 0.0
    %1038 = vmatpush1.msra.mxu0 %v999
    %1039 = vmatprep.subr.mxu0 0.0
    %1040 = vmatpush1.msra.mxu0 %v998
    %1041 = vmatprep.subr.mxu0 0.0
    %1042 = vmatpush1.msra.mxu0 %v997
    %1043 = vmatprep.subr.mxu0 0.0
    %1044 = vmatpush1.msra.mxu0 %v996
    %1045 = vmatprep.subr.mxu0 0.0
    %1046 = vmatpush1.msra.mxu0 %v995
    %1047 = vmatprep.subr.mxu0 0.0
    %1048 = vmatpush1.msra.mxu0 %v994
    %1049 = vmatprep.subr.mxu0 0.0
    %1050 = vmatpush2.msra.mxu0 0.0
    %1051 = vmatprep.subr.mxu0 0.0
    %1052 = vmatpush2.msra.mxu0 0.0
    %1053 = vmatprep.subr.mxu0 0.0
    %1054 = vmatpush2.msra.mxu0 0.0
    %1055 = vmatprep.subr.mxu0 0.0
    %1056 = vmatpush2.msra.mxu0 0.0
    %1057 = vmatprep.subr.mxu0 0.0
    %1058 = vmatpush2.msra.mxu0 0.0
    %1059 = vmatprep.subr.mxu0 0.0
    %1060 = vmatpush2.msra.mxu0 0.0
    %1061 = vmatprep.subr.mxu0 0.0
    %1062 = vmatpush2.msra.mxu0 0.0
    %1063 = vmatprep.subr.mxu0 0.0
    %1064 = vmatpush2.msra.mxu0 0.0
    %1065 = vmatprep.subr.mxu0 0.0
    %1066 = vmatpush2.msra.mxu0 0.0
    %1067 = vmatprep.subr.mxu0 0.0
    %1068 = vmatpush2.msra.mxu0 0.0
    %1069 = vmatprep.subr.mxu0 0.0
    %1070 = vmatpush2.msra.mxu0 0.0
    %1071 = vmatprep.subr.mxu0 0.0
    %1072 = vmatpush2.msra.mxu0 0.0
    %1073 = vmatprep.subr.mxu0 0.0
    %1074 = vmatpush2.msra.mxu0 0.0
    %1075 = vmatprep.subr.mxu0 0.0
    %1076 = vmatpush2.msra.mxu0 0.0
    %1077 = vmatprep.subr.mxu0 0.0
    %1078 = vmatpush2.msra.mxu0 0.0
    %1079 = vmatprep.subr.mxu0 0.0
    %1080 = vmatpush2.msra.mxu0 0.0
    %1081 = vmatprep.mubr.f32.mxu0 0.0
    %1082 = vmatmul.mubr.f32.gmra.mxu0 %v916
    %v1083 = vpop.f32.mrf.mxu0
    %v1084 = vadd.f32 %v1015, %v1083
    %v1085 = vpop.f32.mrf.mxu0
    %1086 = vmatprep.mubr.f32.mxu0 0.0
    %1087 = vmatmul.mubr.f32.gmra.mxu0 %v921
    %v1088 = vpop.f32.mrf.mxu0
    %v1089 = vadd.f32 %v1015, %v1088
    %v1090 = vpop.f32.mrf.mxu0
    %1091 = vmatprep.mubr.f32.mxu0 0.0
    %1092 = vmatmul.mubr.f32.gmra.mxu0 %v926
    %v1093 = vpop.f32.mrf.mxu0
    %v1094 = vadd.f32 %v1015, %v1093
    %v1095 = vpop.f32.mrf.mxu0
    %1096 = vmatprep.mubr.f32.mxu0 0.0
    %1097 = vmatmul.mubr.f32.gmra.mxu0 %v931
    %v1098 = vpop.f32.mrf.mxu0
    %v1099 = vadd.f32 %v1015, %v1098
    %v1100 = vpop.f32.mrf.mxu0
    %1101 = vmatprep.mubr.f32.mxu0 0.0
    %1102 = vmatmul.mubr.f32.gmra.mxu0 %v936
    %v1103 = vpop.f32.mrf.mxu0
    %v1104 = vadd.f32 %v1015, %v1103
    %v1105 = vpop.f32.mrf.mxu0
    %1106 = vmatprep.mubr.f32.mxu0 0.0
    %1107 = vmatmul.mubr.f32.gmra.mxu0 %v941
    %v1108 = vpop.f32.mrf.mxu0
    %v1109 = vadd.f32 %v1015, %v1108
    %v1110 = vpop.f32.mrf.mxu0
    %1111 = vmatprep.mubr.f32.mxu0 0.0
    %1112 = vmatmul.mubr.f32.gmra.mxu0 %v946
    %v1113 = vpop.f32.mrf.mxu0
    %v1114 = vadd.f32 %v1015, %v1113
    %v1115 = vpop.f32.mrf.mxu0
    %1116 = vmatprep.mubr.f32.mxu0 0.0
    %1117 = vmatmul.mubr.f32.gmra.mxu0 %v951
    %v1118 = vpop.f32.mrf.mxu0
    %v1119 = vadd.f32 %v1015, %v1118
    %v1120 = vpop.f32.mrf.mxu0
    %1121 = vmatprep.mubr.f32.mxu0 0.0
    %1122 = vmatmul.mubr.f32.gmra.mxu0 %v956
    %v1123 = vpop.f32.mrf.mxu0
    %v1124 = vadd.f32 %v1015, %v1123
    %v1125 = vpop.f32.mrf.mxu0
    %1126 = vmatprep.mubr.f32.mxu0 0.0
    %1127 = vmatmul.mubr.f32.gmra.mxu0 %v961
    %v1128 = vpop.f32.mrf.mxu0
    %v1129 = vadd.f32 %v1015, %v1128
    %v1130 = vpop.f32.mrf.mxu0
    %1131 = vmatprep.mubr.f32.mxu0 0.0
    %1132 = vmatmul.mubr.f32.gmra.mxu0 %v966
    %v1133 = vpop.f32.mrf.mxu0
    %v1134 = vadd.f32 %v1015, %v1133
    %v1135 = vpop.f32.mrf.mxu0
    %1136 = vmatprep.mubr.f32.mxu0 0.0
    %1137 = vmatmul.mubr.f32.gmra.mxu0 %v971
    %v1138 = vpop.f32.mrf.mxu0
    %v1139 = vadd.f32 %v1015, %v1138
    %v1140 = vpop.f32.mrf.mxu0
    %1141 = vmatprep.mubr.f32.mxu0 0.0
    %1142 = vmatmul.mubr.f32.gmra.mxu0 %v976
    %v1143 = vpop.f32.mrf.mxu0
    %v1144 = vadd.f32 %v1015, %v1143
    %v1145 = vpop.f32.mrf.mxu0
    %1146 = vmatprep.mubr.f32.mxu0 0.0
    %1147 = vmatmul.mubr.f32.gmra.mxu0 %v981
    %v1148 = vpop.f32.mrf.mxu0
    %v1149 = vadd.f32 %v1015, %v1148
    %v1150 = vpop.f32.mrf.mxu0
    %1151 = vmatprep.mubr.f32.mxu0 0.0
    %1152 = vmatmul.mubr.f32.gmra.mxu0 %v986
    %v1153 = vpop.f32.mrf.mxu0
    %v1154 = vadd.f32 %v1015, %v1153
    %v1155 = vpop.f32.mrf.mxu0
    %1156 = vmatprep.mubr.f32.mxu0 0.0
    %1157 = vmatmul.mubr.f32.gmra.mxu0 %v991
    %v1158 = vpop.f32.mrf.mxu0
    %v1159 = vadd.f32 %v1015, %v1158
    %v1160 = vpop.f32.mrf.mxu0
    %1161 = vdwg.mxu0
    %v1162 = vmul.f32 %v489, %v489
    %vm1163 = vcmask 1041408
    %v1164 = vsel %vm1163, %v1162, 0.0
    %1165 = vadd.xlane.f32.xlu0 %v1164
    %v1166 = vpop.xlane.xlu0 %1165
    %v1167 = vadd.f32 %v1166, 1e-12
    %v1168 = vrsqrt.pop %v1167
    %v1169 = vmul.f32 %v489, %v1168
    %v1170 = vmul.f32 %v1084, %v1084
    %v1171 = vmul.f32 %v1089, %v1089
    %v1172 = vmul.f32 %v1094, %v1094
    %v1173 = vmul.f32 %v1099, %v1099
    %v1174 = vmul.f32 %v1104, %v1104
    %v1175 = vmul.f32 %v1109, %v1109
    %v1176 = vmul.f32 %v1114, %v1114
    %v1177 = vmul.f32 %v1119, %v1119
    %v1178 = vmul.f32 %v1124, %v1124
    %v1179 = vmul.f32 %v1129, %v1129
    %v1180 = vmul.f32 %v1134, %v1134
    %v1181 = vmul.f32 %v1139, %v1139
    %v1182 = vmul.f32 %v1144, %v1144
    %v1183 = vmul.f32 %v1149, %v1149
    %v1184 = vmul.f32 %v1154, %v1154
    %v1185 = vmul.f32 %v1159, %v1159
    %1186 = vadd.xlane.f32.xlu0 %v1170
    %v1187 = vpop.xlane.xlu0 %1186
    %1188 = vadd.xlane.f32.xlu0 %v1171
    %v1189 = vpop.xlane.xlu0 %1188
    %1190 = vadd.xlane.f32.xlu0 %v1172
    %v1191 = vpop.xlane.xlu0 %1190
    %1192 = vadd.xlane.f32.xlu0 %v1173
    %v1193 = vpop.xlane.xlu0 %1192
    %1194 = vadd.xlane.f32.xlu0 %v1174
    %v1195 = vpop.xlane.xlu0 %1194
    %1196 = vadd.xlane.f32.xlu0 %v1175
    %v1197 = vpop.xlane.xlu0 %1196
    %1198 = vadd.xlane.f32.xlu0 %v1176
    %v1199 = vpop.xlane.xlu0 %1198
    %1200 = vadd.xlane.f32.xlu0 %v1177
    %v1201 = vpop.xlane.xlu0 %1200
    %1202 = vadd.xlane.f32.xlu0 %v1178
    %v1203 = vpop.xlane.xlu0 %1202
    %1204 = vadd.xlane.f32.xlu0 %v1179
    %v1205 = vpop.xlane.xlu0 %1204
    %1206 = vadd.xlane.f32.xlu0 %v1180
    %v1207 = vpop.xlane.xlu0 %1206
    %1208 = vadd.xlane.f32.xlu0 %v1181
    %v1209 = vpop.xlane.xlu0 %1208
    %1210 = vadd.xlane.f32.xlu0 %v1182
    %v1211 = vpop.xlane.xlu0 %1210
    %1212 = vadd.xlane.f32.xlu0 %v1183
    %v1213 = vpop.xlane.xlu0 %1212
    %1214 = vadd.xlane.f32.xlu0 %v1184
    %v1215 = vpop.xlane.xlu0 %1214
    %1216 = vadd.xlane.f32.xlu0 %v1185
    %v1217 = vpop.xlane.xlu0 %1216
    %v1218 = vadd.f32 %v1187, 1e-12
    %v1219 = vadd.f32 %v1189, 1e-12
    %v1220 = vadd.f32 %v1191, 1e-12
    %v1221 = vadd.f32 %v1193, 1e-12
    %v1222 = vadd.f32 %v1195, 1e-12
    %v1223 = vadd.f32 %v1197, 1e-12
    %v1224 = vadd.f32 %v1199, 1e-12
    %v1225 = vadd.f32 %v1201, 1e-12
    %v1226 = vadd.f32 %v1203, 1e-12
    %v1227 = vadd.f32 %v1205, 1e-12
    %v1228 = vadd.f32 %v1207, 1e-12
    %v1229 = vadd.f32 %v1209, 1e-12
    %v1230 = vadd.f32 %v1211, 1e-12
    %v1231 = vadd.f32 %v1213, 1e-12
    %v1232 = vadd.f32 %v1215, 1e-12
    %v1233 = vadd.f32 %v1217, 1e-12
    %v1234 = vrsqrt.pop %v1218
    %v1235 = vrsqrt.pop %v1219
    %v1236 = vrsqrt.pop %v1220
    %v1237 = vrsqrt.pop %v1221
    %v1238 = vrsqrt.pop %v1222
    %v1239 = vrsqrt.pop %v1223
    %v1240 = vrsqrt.pop %v1224
    %v1241 = vrsqrt.pop %v1225
    %v1242 = vrsqrt.pop %v1226
    %v1243 = vrsqrt.pop %v1227
    %v1244 = vrsqrt.pop %v1228
    %v1245 = vrsqrt.pop %v1229
    %v1246 = vrsqrt.pop %v1230
    %v1247 = vrsqrt.pop %v1231
    %v1248 = vrsqrt.pop %v1232
    %v1249 = vrsqrt.pop %v1233
    %v1250 = vmul.f32 %v1084, %v1234
    %v1251 = vmul.f32 %v1089, %v1235
    %v1252 = vmul.f32 %v1094, %v1236
    %v1253 = vmul.f32 %v1099, %v1237
    %v1254 = vmul.f32 %v1104, %v1238
    %v1255 = vmul.f32 %v1109, %v1239
    %v1256 = vmul.f32 %v1114, %v1240
    %v1257 = vmul.f32 %v1119, %v1241
    %v1258 = vmul.f32 %v1124, %v1242
    %v1259 = vmul.f32 %v1129, %v1243
    %v1260 = vmul.f32 %v1134, %v1244
    %v1261 = vmul.f32 %v1139, %v1245
    %v1262 = vmul.f32 %v1144, %v1246
    %v1263 = vmul.f32 %v1149, %v1247
    %v1264 = vmul.f32 %v1154, %v1248
    %v1265 = vmul.f32 %v1159, %v1249
    %1266 = vmatprep.subr.mxu0 0.0
    %1267 = vmatpush1.xpose.msra.mxu0 %v1265
    %1268 = vmatprep.subr.mxu0 0.0
    %1269 = vmatpush1.xpose.msra.mxu0 %v1264
    %1270 = vmatprep.subr.mxu0 0.0
    %1271 = vmatpush1.xpose.msra.mxu0 %v1263
    %1272 = vmatprep.subr.mxu0 0.0
    %1273 = vmatpush1.xpose.msra.mxu0 %v1262
    %1274 = vmatprep.subr.mxu0 0.0
    %1275 = vmatpush1.xpose.msra.mxu0 %v1261
    %1276 = vmatprep.subr.mxu0 0.0
    %1277 = vmatpush1.xpose.msra.mxu0 %v1260
    %1278 = vmatprep.subr.mxu0 0.0
    %1279 = vmatpush1.xpose.msra.mxu0 %v1259
    %1280 = vmatprep.subr.mxu0 0.0
    %1281 = vmatpush1.xpose.msra.mxu0 %v1258
    %1282 = vmatprep.subr.mxu0 0.0
    %1283 = vmatpush1.xpose.msra.mxu0 %v1257
    %1284 = vmatprep.subr.mxu0 0.0
    %1285 = vmatpush1.xpose.msra.mxu0 %v1256
    %1286 = vmatprep.subr.mxu0 0.0
    %1287 = vmatpush1.xpose.msra.mxu0 %v1255
    %1288 = vmatprep.subr.mxu0 0.0
    %1289 = vmatpush1.xpose.msra.mxu0 %v1254
    %1290 = vmatprep.subr.mxu0 0.0
    %1291 = vmatpush1.xpose.msra.mxu0 %v1253
    %1292 = vmatprep.subr.mxu0 0.0
    %1293 = vmatpush1.xpose.msra.mxu0 %v1252
    %1294 = vmatprep.subr.mxu0 0.0
    %1295 = vmatpush1.xpose.msra.mxu0 %v1251
    %1296 = vmatprep.subr.mxu0 0.0
    %1297 = vmatpush1.xpose.msra.mxu0 %v1250
    %1298 = vmatprep.subr.mxu0 0.0
    %1299 = vmatpush2.xpose.msra.mxu0 0.0
    %1300 = vmatprep.subr.mxu0 0.0
    %1301 = vmatpush2.xpose.msra.mxu0 0.0
    %1302 = vmatprep.subr.mxu0 0.0
    %1303 = vmatpush2.xpose.msra.mxu0 0.0
    %1304 = vmatprep.subr.mxu0 0.0
    %1305 = vmatpush2.xpose.msra.mxu0 0.0
    %1306 = vmatprep.subr.mxu0 0.0
    %1307 = vmatpush2.xpose.msra.mxu0 0.0
    %1308 = vmatprep.subr.mxu0 0.0
    %1309 = vmatpush2.xpose.msra.mxu0 0.0
    %1310 = vmatprep.subr.mxu0 0.0
    %1311 = vmatpush2.xpose.msra.mxu0 0.0
    %1312 = vmatprep.subr.mxu0 0.0
    %1313 = vmatpush2.xpose.msra.mxu0 0.0
    %1314 = vmatprep.subr.mxu0 0.0
    %1315 = vmatpush2.xpose.msra.mxu0 0.0
    %1316 = vmatprep.subr.mxu0 0.0
    %1317 = vmatpush2.xpose.msra.mxu0 0.0
    %1318 = vmatprep.subr.mxu0 0.0
    %1319 = vmatpush2.xpose.msra.mxu0 0.0
    %1320 = vmatprep.subr.mxu0 0.0
    %1321 = vmatpush2.xpose.msra.mxu0 0.0
    %1322 = vmatprep.subr.mxu0 0.0
    %1323 = vmatpush2.xpose.msra.mxu0 0.0
    %1324 = vmatprep.subr.mxu0 0.0
    %1325 = vmatpush2.xpose.msra.mxu0 0.0
    %1326 = vmatprep.subr.mxu0 0.0
    %1327 = vmatpush2.xpose.msra.mxu0 0.0
    %1328 = vmatprep.subr.mxu0 0.0
    %1329 = vmatpush2.xpose.msra.mxu0 0.0
    %1330 = vmatprep.mubr.f32.mxu0 0.0
    %1331 = vmatmul.mubr.f32.gmra.mxu0 %v1169
    %v1332 = vpop.f32.mrf.mxu0
    %v1333 = vadd.f32 0.0, %v1332
    %v1334 = vpop.f32.mrf.mxu0
    %1335 = vdwg.mxu0
    %s1336 = sld [smem:[#allocation2]]
    %v1337 = vstv %s1336
    %v1338 = vmul.f32 %v1337, 1.442695
    %v1339 = vpow.pop %v1338
    %s1340 = vtos %v1339
    %v1341 = vstv %s1340
    %v1342 = vmul.f32 %v1341, %v1333
    %1343 = vst [vmem:[#allocation3] sm:$0x3] %v1342
    // Predicated region
    $region34: #{siglip_forward.1} parent=1 // pred_check
      _
    $region35: #{siglip_forward.1} parent=1 // pred_check_branch
      %1345 = sbr.rel (0) target = $region37
    $region36: #{siglip_forward.1} parent=1 // pred_region
      %s1347 = ssub.s32 32, 32
      %1348 = vsyncadd [#allocation4], %s1347
      %s1350 = sshll.u32 [#allocation3], 4
      %s1351 = int_to_ptr.vmem [resolvable:$true] %s1350
      %1353 = dma.vmem_to_hbm [thread:$0]  %s1351, 32, %s8, [#allocation4]
    $region37: #{siglip_forward.1} parent=1 // pred_fallthru
      _
    // Predicated region
    $region38: #{siglip_forward.1} parent=1 // pred_check
      _
    $region39: #{siglip_forward.1} parent=1 // pred_check_branch
      %1355 = sbr.rel (0) target = $region41
    $region40: #{siglip_forward.1} parent=1 // pred_region
      %1356 = dma.done [#allocation4], 32
    $region41: #{siglip_forward.1} parent=1 // pred_fallthru
      _
    %1357 = vsyncpa [#allocation4], 1

</llo_original>
